<compile_context>
chip_gen: v5e
topology: v5e:2x2
jax: 0.10.0
libtpu: 0.0.40
codegen_flags: <defaults>
</compile_context>

<pallas_src>
import functools

import jax
import jax.numpy as jnp
from jax.experimental import pallas as pl
from jax.experimental.pallas import tpu as pltpu


def _round_up(x, m):
    return ((x + m - 1) // m) * m


def _fc_kernel(x_ref, w_ref, b_ref, o_ref):
    # x_ref: (tm, C_in)  w_ref: (tn, C_in)  b_ref: (1, tn)  o_ref: (tm, tn)
    acc = jax.lax.dot_general(
        x_ref[...], w_ref[...],
        dimension_numbers=(((1,), (1,)), ((), ())),   # contract last dims: x @ W.T
        preferred_element_type=jnp.float32,
    )
    o_ref[...] = (acc + b_ref[...]).astype(o_ref.dtype)


@functools.partial(jax.jit, static_argnames=("tile_m", "compute_dtype"))
def encoder_with_fc(x, weight, bias, *, tile_m=256, compute_dtype=None):
    """EncoderWithFC forward.

    x:      (B, T, C_in)  sequence features.
    weight: (H, C_in)     nn.Linear weight (PyTorch layout, NOT transposed).
    bias:   (H,)          nn.Linear bias.
    compute_dtype: optionally cast x / weight (e.g. jnp.bfloat16) for the MXU;
                   accumulation stays float32.
    """
    B, T, C_in = x.shape
    H = weight.shape[0]
    M = B * T
    out_dtype = x.dtype

    # ---- tile selection -----------------------------------------------------
    # Rows: use up to tile_m rows per step, but don't blow up tiny demo shapes.
    tm = min(tile_m, _round_up(M, 8))
    M_pad = _round_up(M, tm)

    # Hidden: pad to a lane-dense multiple of 128, then pick the largest
    # standard N tile that divides it.
    H_pad = _round_up(H, 128)
    tn = 128
    for cand in (512, 256, 128):
        if H_pad % cand == 0:
            tn = cand
            break

    # ---- operand prep (one-time, cheap layout plumbing) ---------------------
    x2d = x.reshape(M, C_in)
    if compute_dtype is not None:
        x2d = x2d.astype(compute_dtype)
        weight = weight.astype(compute_dtype)
    if M_pad != M:
        x2d = jnp.pad(x2d, ((0, M_pad - M), (0, 0)))
    w = weight
    b = bias.astype(jnp.float32)
    if H_pad != H:
        w = jnp.pad(w, ((0, H_pad - H), (0, 0)))
        b = jnp.pad(b, ((0, H_pad - H),))
    b2d = b.reshape(1, H_pad)

    grid = (M_pad // tm, H_pad // tn)

    out2d = pl.pallas_call(
        _fc_kernel,
        out_shape=jax.ShapeDtypeStruct((M_pad, H_pad), out_dtype),
        grid_spec=pltpu.PrefetchScalarGridSpec(
            num_scalar_prefetch=0,
            grid=grid,
            in_specs=[
                pl.BlockSpec((tm, C_in), lambda i, j: (i, 0)),   # x rows
                pl.BlockSpec((tn, C_in), lambda i, j: (j, 0)),   # W rows (H,C_in)
                pl.BlockSpec((1, tn), lambda i, j: (0, j)),      # bias slice
            ],
            out_specs=pl.BlockSpec((tm, tn), lambda i, j: (i, j)),
        ),
        compiler_params=pltpu.CompilerParams(
            dimension_semantics=("parallel", "parallel"),
            vmem_limit_bytes=64 * 1024 * 1024,
        ),
    )(x2d, w, b2d)

    # Strip padding, restore (B, T, H).
    return out2d[:M, :H].reshape(B, T, H)


if __name__ == "__main__":
    # Small shapes consistent with the neck: batch=2, seq=8, in_channels=32,
    # hidden_size=64.
    B, T, C_in, H = 2, 8, 32, 64

    key = jax.random.PRNGKey(0)
    kx, kw, kb = jax.random.split(key, 3)

    x = jax.random.normal(kx, (B, T, C_in), dtype=jnp.float32)
    # Deterministic parameter init (nn.Linear-style uniform bound).
    bound = 1.0 / (C_in ** 0.5)
    weight = jax.random.uniform(kw, (H, C_in), jnp.float32, -bound, bound)
    bias = jax.random.uniform(kb, (H,), jnp.float32, -bound, bound)

    y = encoder_with_fc(x, weight, bias)
    y = jax.block_until_ready(y)

    # Reference check against plain JAX (same semantics as torch.nn.Linear).
    y_ref = x @ weight.T + bias
    assert y.shape == (B, T, H)
    assert jnp.allclose(y, y_ref, atol=1e-5, rtol=1e-5)

    print("KERNEL_OK")
</pallas_src>

<mosaic_0001>
module attributes {stable_mosaic.version = 11 : i64} {
  func.func @_fc_kernel(%arg0: i32, %arg1: i32, %arg2: memref<16x32xf32, #tpu.memory_space<vmem>>, %arg3: memref<128x32xf32, #tpu.memory_space<vmem>>, %arg4: memref<1x128xf32, #tpu.memory_space<vmem>>, %arg5: memref<16x128xf32, #tpu.memory_space<vmem>>) attributes {dimension_semantics = [#tpu.dimension_semantics<parallel>, #tpu.dimension_semantics<parallel>], iteration_bounds = array<i64: 1, 1>, scalar_prefetch = 0 : i64, scratch_operands = 0 : i64, tpu.core_type = #tpu.core_type<tc>, window_params = [{transform_indices = @transform_0, window_bounds = array<i64: 16, 32>}, {transform_indices = @transform_1, window_bounds = array<i64: 128, 32>}, {transform_indices = @transform_2, window_bounds = array<i64: 1, 128>}, {transform_indices = @transform_3, window_bounds = array<i64: 16, 128>}]} {
    %c0 = arith.constant 0 : index
    %c0_0 = arith.constant 0 : index
    %0 = vector.load %arg2[%c0, %c0_0] : memref<16x32xf32, #tpu.memory_space<vmem>>, vector<16x32xf32>
    %c0_1 = arith.constant 0 : index
    %c0_2 = arith.constant 0 : index
    %1 = vector.load %arg3[%c0_1, %c0_2] : memref<128x32xf32, #tpu.memory_space<vmem>>, vector<128x32xf32>
    %cst = arith.constant dense<0.000000e+00> : vector<16x128xf32>
    %2 = tpu.matmul %0, %1, %cst {dimension_numbers = #tpu.dot_dimension_numbers<[1], [1], [0], [0], [0, 0, 1, 0], [], []>} : vector<16x32xf32>, vector<128x32xf32>, vector<16x128xf32> -> vector<16x128xf32>
    %c0_3 = arith.constant 0 : index
    %c0_4 = arith.constant 0 : index
    %3 = vector.load %arg4[%c0_3, %c0_4] : memref<1x128xf32, #tpu.memory_space<vmem>>, vector<1x128xf32>
    %4 = vector.broadcast %3 : vector<1x128xf32> to vector<16x128xf32>
    %5 = arith.addf %2, %4 : vector<16x128xf32>
    %c0_5 = arith.constant 0 : index
    %c0_6 = arith.constant 0 : index
    %6 = vector.load %arg5[%c0_5, %c0_6] : memref<16x128xf32, #tpu.memory_space<vmem>>, vector<16x128xf32>
    tpu.vector_store %arg5[%c0_5, %c0_6], %5 {strides = array<i32>} : memref<16x128xf32, #tpu.memory_space<vmem>>, vector<16x128xf32>,
    return
  }
  func.func @transform_0(%arg0: i32, %arg1: i32) -> (i32, i32) {
    %c0_i32 = arith.constant 0 : i32
    %c0_i32_0 = arith.constant 0 : i32
    return %arg0, %c0_i32 : i32, i32
  }
  func.func @transform_1(%arg0: i32, %arg1: i32) -> (i32, i32) {
    %c0_i32 = arith.constant 0 : i32
    %c0_i32_0 = arith.constant 0 : i32
    return %arg1, %c0_i32 : i32, i32
  }
  func.func @transform_2(%arg0: i32, %arg1: i32) -> (i32, i32) {
    %c0_i32 = arith.constant 0 : i32
    %c0_i32_0 = arith.constant 0 : i32
    return %c0_i32, %arg1 : i32, i32
  }
  func.func @transform_3(%arg0: i32, %arg1: i32) -> (i32, i32) {
    %c0_i32 = arith.constant 0 : i32
    return %arg0, %arg1 : i32, i32
  }
}

</mosaic_0001>

<llo_original>
// kernel: encoder_with_fc.1
$region0: #{encoder_with_fc.1}
  #allocation0 [shape = 'u32[]', space=smem, size = 0x4, offset = 0x4, fixed_abs, tag = 'smem constant byte address 0x4 - core index']
  #allocation1 [shape = 'u32[72,128]{1,0:T(1,128)}', space=vmem, size = 0x9000, scoped, tag = 'internal scratch']
  %s0 = inlined_call_operand.vmem [shape: f32[16,32], index: 0, kind: input, shape index: {}]
  %s1 = inlined_call_operand.vmem [shape: f32[128,32], index: 1, kind: input, shape index: {}]
  %s2 = inlined_call_operand.vmem [shape: f32[1,128], index: 2, kind: input, shape index: {}]
  %s3 = inlined_call_operand.vmem [shape: f32[16,128], index: 3, kind: output, shape index: {}]
  %s4 = sld [smem:[#allocation0]]
  $region22: #{encoder_with_fc.1} parent=0
    _
  %s6 = ssub.s32 1, %s4
  %s7 = scalar_select 0, %s6, %s4
  // Predicated region
  $region2: #{encoder_with_fc.1} parent=0 // pred_check
    _
  $region3: #{encoder_with_fc.1} parent=0 // pred_check_branch
    %9 = sbr.rel (0) target = $region5
  $region4: #{encoder_with_fc.1} parent=0 // pred_region
    _
  $region5: #{encoder_with_fc.1} parent=0 // pred_fallthru
    _
  // Predicated region
  $region6: #{encoder_with_fc.1} parent=0 // pred_check
    _
  $region7: #{encoder_with_fc.1} parent=0 // pred_check_branch
    %11 = sbr.rel (0) target = $region9
  $region8: #{encoder_with_fc.1} parent=0 // pred_region
    _
  $region9: #{encoder_with_fc.1} parent=0 // pred_fallthru
    _
  // Predicated region
  $region10: #{encoder_with_fc.1} parent=0 // pred_check
    _
  $region11: #{encoder_with_fc.1} parent=0 // pred_check_branch
    %13 = sbr.rel (0) target = $region13
  $region12: #{encoder_with_fc.1} parent=0 // pred_region
    _
  $region13: #{encoder_with_fc.1} parent=0 // pred_fallthru
    _
  %v14 = vld [vmem:[%s0] sm:$0xff]
  %v15 = vld [vmem:[%s0 + $0x8] sm:$0xff]
  %v16 = vld [vmem:[%s1] sm:$0xff]
  %v17 = vld [vmem:[%s1 + $0x8] sm:$0xff]
  %v18 = vld [vmem:[%s1 + $0x10] sm:$0xff]
  %v19 = vld [vmem:[%s1 + $0x18] sm:$0xff]
  %v20 = vld [vmem:[%s1 + $0x20] sm:$0xff]
  %v21 = vld [vmem:[%s1 + $0x28] sm:$0xff]
  %v22 = vld [vmem:[%s1 + $0x30] sm:$0xff]
  %v23 = vld [vmem:[%s1 + $0x38] sm:$0xff]
  %v24 = vld [vmem:[%s1 + $0x40] sm:$0xff]
  %v25 = vld [vmem:[%s1 + $0x48] sm:$0xff]
  %v26 = vld [vmem:[%s1 + $0x50] sm:$0xff]
  %v27 = vld [vmem:[%s1 + $0x58] sm:$0xff]
  %v28 = vld [vmem:[%s1 + $0x60] sm:$0xff]
  %v29 = vld [vmem:[%s1 + $0x68] sm:$0xff]
  %v30 = vld [vmem:[%s1 + $0x70] sm:$0xff]
  %v31 = vld [vmem:[%s1 + $0x78] sm:$0xff]
  %v32 = vld [vmem:[%s2] sm:$0x1]
  %v34 = vperm.slane %v32, 0
  %vm36 = vcmask 261120
  %v38 = vsel %vm36, %v14, 0
  %v41 = vsel %vm36, %v15, 0
  %v44 = vsel %vm36, %v16, 0
  %v47 = vsel %vm36, %v17, 0
  %v50 = vsel %vm36, %v18, 0
  %v53 = vsel %vm36, %v19, 0
  %v56 = vsel %vm36, %v20, 0
  %v59 = vsel %vm36, %v21, 0
  %v62 = vsel %vm36, %v22, 0
  %v65 = vsel %vm36, %v23, 0
  %v68 = vsel %vm36, %v24, 0
  %v71 = vsel %vm36, %v25, 0
  %v74 = vsel %vm36, %v26, 0
  %v77 = vsel %vm36, %v27, 0
  %v80 = vsel %vm36, %v28, 0
  %v83 = vsel %vm36, %v29, 0
  %v86 = vsel %vm36, %v30, 0
  %v89 = vsel %vm36, %v31, 0
  %91 = vmatpush.xpose.msra.mxu0 %v89
  %92 = vmatpush.xpose.msra.mxu0 %v86
  %93 = vmatpush.xpose.msra.mxu0 %v83
  %94 = vmatpush.xpose.msra.mxu0 %v80
  %95 = vmatpush.xpose.msra.mxu0 %v77
  %96 = vmatpush.xpose.msra.mxu0 %v74
  %97 = vmatpush.xpose.msra.mxu0 %v71
  %98 = vmatpush.xpose.msra.mxu0 %v68
  %99 = vmatpush.xpose.msra.mxu0 %v65
  %100 = vmatpush.xpose.msra.mxu0 %v62
  %101 = vmatpush.xpose.msra.mxu0 %v59
  %102 = vmatpush.xpose.msra.mxu0 %v56
  %103 = vmatpush.xpose.msra.mxu0 %v53
  %104 = vmatpush.xpose.msra.mxu0 %v50
  %105 = vmatpush.xpose.msra.mxu0 %v47
  %106 = vmatpush.xpose.msra.mxu0 %v44
  %107 = vmatmul.f32.gmra.mxu0 %v38
  %v108 = vpop.f32.mrf.mxu0
  %v109 = vadd.f32 %v34, %v108
  %110 = vmatmul.f32.gmra.mxu0 %v41
  %v111 = vpop.f32.mrf.mxu0
  %v112 = vadd.f32 %v34, %v111
  %113 = vdwg.mxu0
  %114 = vst [vmem:[%s3] sm:$0xff] %v109
  %115 = vst [vmem:[%s3 + $0x8] sm:$0xff] %v112
  // Predicated region
  $region14: #{encoder_with_fc.1} parent=0 // pred_check
    _
  $region15: #{encoder_with_fc.1} parent=0 // pred_check_branch
    %117 = sbr.rel (0) target = $region17
  $region16: #{encoder_with_fc.1} parent=0 // pred_region
    _
  $region17: #{encoder_with_fc.1} parent=0 // pred_fallthru
    _
  // Predicated region
  $region18: #{encoder_with_fc.1} parent=0 // pred_check
    _
  $region19: #{encoder_with_fc.1} parent=0 // pred_check_branch
    %119 = sbr.rel (0) target = $region21
  $region20: #{encoder_with_fc.1} parent=0 // pred_region
    _
  $region21: #{encoder_with_fc.1} parent=0 // pred_fallthru
    _

</llo_original>
